<compile_context>
chip_gen: v6e
topology: v6e:2x2x1
jax: 0.10.0
libtpu: 0.0.40
codegen_flags: <defaults>
</compile_context>

<pallas_src>
import functools
import numpy as np
import jax
import jax.numpy as jnp
from jax.experimental import pallas as pl
from jax.experimental.pallas import tpu as pltpu

BN_EPS = 1e-5
BN_SCALE = float(1.0 / np.sqrt(1.0 + BN_EPS))   # fresh (untrained) BN, eval mode

# 48 MiB: above v5e's 16 MiB / v6e's 32 MiB default scoped-VMEM limits and
# below v7x's 64 MiB physical VMEM (leaves headroom for compiler temporaries).
VMEM_LIMIT_BYTES = 48 * 1024 * 1024
WEIGHT_VMEM_BUDGET = 10 * 1024 * 1024   # per-block conv-weight residency budget


def _round_up(x, m):
    return ((x + m - 1) // m) * m


def _split_tile(dim, cap, align):
    """(padded_dim, tile): tile <= cap, tile % align == 0, tile | padded_dim."""
    dp = _round_up(dim, align)
    nt = -(-dp // cap)
    t = _round_up(-(-dp // nt), align)
    return nt * t, t


# ---------------------------------------------------------------------------
# Pallas kernel 1: out = act( x @ w + bias [+ residual] )
# grid = (M_tiles, N_tiles, K_tiles), K innermost; f32 accumulation in VMEM.
# Used for all 1x1 convs and the two strided convs (conv1, layer2 block0).
# ---------------------------------------------------------------------------
def _mm_kernel(*refs, relu, has_residual):
    if has_residual:
        x_ref, w_ref, b_ref, r_ref, o_ref, acc_ref = refs
    else:
        x_ref, w_ref, b_ref, o_ref, acc_ref = refs
    k = pl.program_id(2)

    @pl.when(k == 0)
    def _():
        acc_ref[...] = jnp.zeros_like(acc_ref)

    acc_ref[...] += jnp.dot(x_ref[...], w_ref[...],
                            preferred_element_type=jnp.float32)

    @pl.when(k == pl.num_programs(2) - 1)
    def _():
        y = acc_ref[...] + b_ref[...]
        if has_residual:
            y = y + r_ref[...].astype(jnp.float32)
        if relu:
            y = jnp.maximum(y, 0.0)
        o_ref[...] = y.astype(o_ref.dtype)


def fused_matmul_bias_act(x, w, bias, relu, residual=None):
    """y[m,n] = act( sum_k x[m,k] w[k,n] + bias[n] [+ residual[m,n]] )."""
    M, K = x.shape
    _, N = w.shape
    # Large tiles keep arithmetic intensity above the HBM roofline on all
    # three generations while staying well inside the 48 MiB VMEM budget
    # (~18 MiB peak with double buffering).
    Mp, TM = _split_tile(M, 512, 16)
    Kp, TK = _split_tile(K, 2048, 128)
    if N < 128:
        # tiny-Cout layers (cls 512->21, final 21->7): keep the true Cout as a
        # full-dim output block instead of padding to 128 lanes -> far fewer
        # output HBM bytes at full resolution (masked stores < extra traffic).
        Np, TN = N, N
    else:
        Np, TN = _split_tile(N, 1024, 128)

    xp = x.astype(jnp.bfloat16)
    if (Mp, Kp) != (M, K):
        xp = jnp.pad(xp, ((0, Mp - M), (0, Kp - K)))
    wp = w.astype(jnp.bfloat16)
    if (Kp, Np) != (K, N):
        wp = jnp.pad(wp, ((0, Kp - K), (0, Np - N)))
    bp = bias.astype(jnp.float32)
    if Np != N:
        bp = jnp.pad(bp, (0, Np - N))
    bp = bp.reshape(1, Np)

    has_res = residual is not None
    inputs = [xp, wp, bp]
    in_specs = [
        pl.BlockSpec((TM, TK), lambda m, n, k: (m, k)),
        pl.BlockSpec((TK, TN), lambda m, n, k: (k, n)),
        pl.BlockSpec((1, TN), lambda m, n, k: (0, n)),
    ]
    if has_res:
        rp = residual.astype(jnp.bfloat16)
        if (Mp, Np) != (M, N):
            rp = jnp.pad(rp, ((0, Mp - M), (0, Np - N)))
        inputs.append(rp)
        in_specs.append(pl.BlockSpec((TM, TN), lambda m, n, k: (m, n)))

    mt, nt, kt = Mp // TM, Np // TN, Kp // TK
    flops = 2 * Mp * Np * Kp
    # includes the tiling re-fetch factors (x read nt times, w read mt times).
    bytes_accessed = 2 * (Mp * Kp * nt + Kp * Np * mt + Mp * Np) + 4 * Np
    if has_res:
        bytes_accessed += 2 * Mp * Np

    out = pl.pallas_call(
        functools.partial(_mm_kernel, relu=relu, has_residual=has_res),
        out_shape=jax.ShapeDtypeStruct((Mp, Np), jnp.bfloat16),
        grid_spec=pltpu.PrefetchScalarGridSpec(
            num_scalar_prefetch=0,
            grid=(mt, nt, kt),
            in_specs=in_specs,
            out_specs=pl.BlockSpec((TM, TN), lambda m, n, k: (m, n)),
            scratch_shapes=[pltpu.VMEM((TM, TN), jnp.float32)],
        ),
        compiler_params=pltpu.CompilerParams(
            dimension_semantics=("parallel", "parallel", "arbitrary"),
            vmem_limit_bytes=VMEM_LIMIT_BYTES),
        cost_estimate=pl.CostEstimate(flops=int(flops), transcendentals=0,
                                      bytes_accessed=int(bytes_accessed)),
    )(*inputs)
    if (Mp, Np) != (M, N):
        out = out[:M, :N]
    return out


# ---------------------------------------------------------------------------
# Pallas kernel 2: stride-1 "same" KxK conv with in-kernel im2col.
# The padded activation stays in HBM (pl.ANY); each grid step DMAs one flat
# row-slab into VMEM and runs KH*KW shifted matmuls that accumulate in f32.
# ---------------------------------------------------------------------------
def _conv_s1_kernel(x_hbm, w_ref, b_ref, o_ref, slab_ref, sem, *,
                    tm, lin, slab_rows, offsets, relu):
    n = pl.program_id(0)      # batch image
    m = pl.program_id(2)      # flat output-row tile within the image
    start = n * lin + m * tm
    cp = pltpu.make_async_copy(x_hbm.at[pl.ds(start, slab_rows)], slab_ref, sem)
    cp.start()
    cp.wait()   # TODO(synk): double-buffer the slab across m-tiles to hide DMA.
    acc = None
    for i, off in enumerate(offsets):        # static, unrolled over kernel taps
        part = jnp.dot(slab_ref[off:off + tm, :], w_ref[i],
                       preferred_element_type=jnp.float32)
        acc = part if acc is None else acc + part
    acc = acc + b_ref[...]
    if relu:
        acc = jnp.maximum(acc, 0.0)
    o_ref[...] = acc.astype(o_ref.dtype)


def conv_stride1_same(x, w, bias, *, dilation, relu):
    """stride-1 'same' KxK conv; im2col happens inside the kernel."""
    N, H, W, Cin = x.shape
    KH, KW, _, Cout = w.shape
    ph = dilation * (KH - 1) // 2
    pw = dilation * (KW - 1) // 2
    OH, OW = H, W
    Wp = W + 2 * pw
    # In flattened padded-image coordinates, output base b = oh*Wp + ow reads
    # input rows b + off(kh,kw); no column wrap since ow + d*kw < Wp.
    offsets = tuple(dilation * (kh * Wp + kw)
                    for kh in range(KH) for kw in range(KW))
    max_off = offsets[-1]

    TM = min(512, _round_up(OH * Wp, 8))
    M_img = _round_up(OH * Wp, TM)           # includes the 2*pw pad cols per row
    m_tiles = M_img // TM
    slab_rows = TM + max_off
    lin_needed = M_img + max_off             # rows one image's tiles may touch
    Hp_ext = max(-(-lin_needed // Wp), H + 2 * ph)
    Lin = Hp_ext * Wp                        # per-image stride in the flat array

    # Weight stays fully VMEM-resident unless it exceeds the residency budget
    # (only the 2048->512 FCN-head conv splits, into 2 x ~9.4 MiB Cout halves,
    # which also keeps v7x's 64 MiB VMEM comfortable).
    TCout = Cout
    while (TCout > 128 and TCout % 2 == 0
           and KH * KW * Cin * TCout * 2 > WEIGHT_VMEM_BUDGET):
        TCout //= 2
    co_tiles = Cout // TCout

    xb = x.astype(jnp.bfloat16)
    x_pad = jnp.pad(xb, ((0, 0), (ph, Hp_ext - H - ph), (pw, pw), (0, 0)))
    x_flat = x_pad.reshape(N * Lin, Cin)
    wf = w.astype(jnp.bfloat16).reshape(KH * KW, Cin, Cout)
    bf = bias.astype(jnp.float32).reshape(1, Cout)

    flops = 2 * N * M_img * KH * KW * Cin * Cout
    bytes_accessed = (2 * N * Lin * Cin * co_tiles        # slab reads per co tile
                      + 2 * KH * KW * Cin * Cout          # weights read once
                      + 2 * N * M_img * Cout + 4 * Cout)

    out = pl.pallas_call(
        functools.partial(_conv_s1_kernel, tm=TM, lin=Lin, slab_rows=slab_rows,
                          offsets=offsets, relu=relu),
        out_shape=jax.ShapeDtypeStruct((N * M_img, Cout), jnp.bfloat16),
        grid_spec=pltpu.PrefetchScalarGridSpec(
            num_scalar_prefetch=0,
            grid=(N, co_tiles, m_tiles),   # m innermost -> weight block revisited
            in_specs=[
                pl.BlockSpec(memory_space=pl.ANY),                     # x in HBM
                pl.BlockSpec((KH * KW, Cin, TCout), lambda n, co, m: (0, 0, co)),
                pl.BlockSpec((1, TCout), lambda n, co, m: (0, co)),
            ],
            out_specs=pl.BlockSpec((TM, TCout),
                                   lambda n, co, m: (n * m_tiles + m, co)),
            scratch_shapes=[pltpu.VMEM((slab_rows, Cin), jnp.bfloat16),
                            pltpu.SemaphoreType.DMA(())],
        ),
        compiler_params=pltpu.CompilerParams(
            dimension_semantics=("parallel", "parallel", "parallel"),
            vmem_limit_bytes=VMEM_LIMIT_BYTES),
        cost_estimate=pl.CostEstimate(flops=int(flops), transcendentals=0,
                                      bytes_accessed=int(bytes_accessed)),
    )(x_flat, wf, bf)
    out = out.reshape(N, M_img, Cout)[:, :OH * Wp, :]
    return out.reshape(N, OH, Wp, Cout)[:, :, :OW, :]


# ---------------------------------------------------------------------------
# Conv2d (+ bias, + optional residual add, + optional ReLU) dispatcher.
# x: (N, H, W, Cin)  w: (KH, KW, Cin, Cout); BN scale already folded into w.
# ---------------------------------------------------------------------------
@functools.partial(jax.jit, static_argnames=("stride", "padding", "dilation", "relu"))
def conv_bias_act(x, w, bias, residual, *, stride, padding, dilation, relu):
    N, H, W, Cin = x.shape
    KH, KW, _, Cout = w.shape
    OH = (H + 2 * padding - dilation * (KH - 1) - 1) // stride + 1
    OW = (W + 2 * padding - dilation * (KW - 1) - 1) // stride + 1
    x = x.astype(jnp.bfloat16)
    if KH == 1 and KW == 1 and padding == 0:
        # 1x1 conv fast path: no im2col, just a (strided) reshape.
        xs = x if stride == 1 else x[:, ::stride, ::stride, :]
        patches = xs.reshape(N * OH * OW, Cin)
    elif (stride == 1 and residual is None
          and padding == dilation * (KH - 1) // 2
          and padding == dilation * (KW - 1) // 2):
        # stride-1 KxK conv: in-kernel im2col (no 9x patch tensor in HBM).
        return conv_stride1_same(x, w, bias, dilation=dilation, relu=relu)
    else:
        # Fallback (only conv1 7x7 s2 and the single 3x3 s2 conv in layer2):
        # materialized im2col.
        # TODO(synk): conv1 could use a 2x2 space-to-depth to shrink the 49-way
        # concatenate; it is a one-off at half resolution so left in plain JAX.
        xp = jnp.pad(x, ((0, 0), (padding, padding), (padding, padding), (0, 0)))
        cols = []
        for kh in range(KH):
            for kw in range(KW):
                cols.append(
                    xp[:,
                       kh * dilation: kh * dilation + (OH - 1) * stride + 1: stride,
                       kw * dilation: kw * dilation + (OW - 1) * stride + 1: stride,
                       :])
        patches = jnp.concatenate(cols, axis=3).reshape(N * OH * OW, KH * KW * Cin)
    wm = w.reshape(KH * KW * Cin, Cout)
    res2d = None if residual is None else residual.reshape(N * OH * OW, Cout)
    y = fused_matmul_bias_act(patches, wm, bias, relu, res2d)
    return y.reshape(N, OH, OW, Cout)


def _zeros(c):
    return jnp.zeros((c,), jnp.float32)


# ---------------------------------------------------------------------------
# Deterministic parameter construction (synthetic He-style init, expansion=4)
# BN scale folded into the conv weights; weights stored in bf16.
# ---------------------------------------------------------------------------
class ParamGen:
    def __init__(self, key):
        self.key = key
        self.cnt = 0

    def conv(self, kh, kw, cin, cout, gain=1.0, fold_bn=False):
        self.cnt += 1
        k = jax.random.fold_in(self.key, self.cnt)
        std = gain * float(np.sqrt(2.0 / (kh * kw * cin)))
        w = jax.random.normal(k, (kh, kw, cin, cout), jnp.float32) * std
        if fold_bn:
            w = w * BN_SCALE   # eval-mode fresh BN folded into weights
        return w.astype(jnp.bfloat16)


def make_bottleneck(pg, inplanes, planes, stride, dilation, downsample):
    p = {
        "w1": pg.conv(1, 1, inplanes, planes, fold_bn=True),
        "w2": pg.conv(3, 3, planes, planes, fold_bn=True),
        # small gain on the expansion conv keeps the 33-block residual stack
        # numerically tame (synthetic stand-in for zero-init residual BN).
        "w3": pg.conv(1, 1, planes, planes * 4, gain=0.1, fold_bn=True),
        "stride": stride,
        "dilation": dilation,
    }
    if downsample:
        p["wd"] = pg.conv(1, 1, inplanes, planes * 4, fold_bn=True)
    return p


def make_params(seed=0):
    pg = ParamGen(jax.random.PRNGKey(seed))
    P = {"conv1": pg.conv(7, 7, 3, 64, fold_bn=True)}
    layers = []
    inplanes, dilation = 64, 1
    # (planes, num_blocks, stride, dilate) matching resnet101 with
    # replace_stride_with_dilation = [False, True, True]
    cfg = [(64, 3, 1, False), (128, 4, 2, False),
           (256, 23, 2, True), (512, 3, 2, True)]
    for planes, blocks, stride, dilate in cfg:
        prev_dil = dilation
        if dilate:
            dilation *= stride
            stride = 1
        ds = (stride != 1) or (inplanes != planes * 4)
        blk_list = [make_bottleneck(pg, inplanes, planes, stride, prev_dil, ds)]
        inplanes = planes * 4
        for _ in range(blocks - 1):
            blk_list.append(make_bottleneck(pg, inplanes, planes, 1, dilation, False))
        layers.append(blk_list)
    P["layers"] = layers
    # FCNHead: Conv2d(2048,512,3,p1,bias=False)+BN+ReLU+Dropout, Conv2d(512,21,1)
    P["head_w"] = pg.conv(3, 3, 2048, 512, fold_bn=True)
    P["cls_w"] = pg.conv(1, 1, 512, 21)
    P["cls_b"] = jnp.zeros((21,), jnp.float32)
    # extra nn.Conv2d(21, 7, 3, 1, 1)
    P["final_w"] = pg.conv(3, 3, 21, 7)
    P["final_b"] = jnp.zeros((7,), jnp.float32)
    return P


# ---------------------------------------------------------------------------
# Forward pass
# ---------------------------------------------------------------------------
def bottleneck_fwd(x, p):
    c1, c2, c3 = p["w1"].shape[-1], p["w2"].shape[-1], p["w3"].shape[-1]
    out = conv_bias_act(x, p["w1"], _zeros(c1), None,
                        stride=1, padding=0, dilation=1, relu=True)
    out = conv_bias_act(out, p["w2"], _zeros(c2), None,
                        stride=p["stride"], padding=p["dilation"],
                        dilation=p["dilation"], relu=True)
    if "wd" in p:
        identity = conv_bias_act(x, p["wd"], _zeros(c3), None,
                                 stride=p["stride"], padding=0, dilation=1,
                                 relu=False)
    else:
        identity = x
    # residual add + final ReLU fused into the expansion-conv kernel epilogue.
    return conv_bias_act(out, p["w3"], _zeros(c3), identity,
                         stride=1, padding=0, dilation=1, relu=True)


def resnet101_fcn_forward(x_nchw, P):
    # layout: NCHW in/out (PyTorch convention), NHWC + bf16 internally.
    x = jnp.transpose(x_nchw, (0, 2, 3, 1)).astype(jnp.bfloat16)
    N, H, W, _ = x.shape
    x = conv_bias_act(x, P["conv1"], _zeros(64), None,
                      stride=2, padding=3, dilation=1, relu=True)
    # TODO(synk): MaxPool2d(3,2,1) stays in plain JAX (cheap windowed max).
    x = jax.lax.reduce_window(x, jnp.array(-jnp.inf, x.dtype), jax.lax.max,
                              (1, 3, 3, 1), (1, 2, 2, 1),
                              [(0, 0), (1, 1), (1, 1), (0, 0)])
    for layer in P["layers"]:
        for blk in layer:
            x = bottleneck_fwd(x, blk)
    # FCN head (Dropout(p=0.1) is identity in eval mode).
    x = conv_bias_act(x, P["head_w"], _zeros(512), None,
                      stride=1, padding=1, dilation=1, relu=True)
    x = conv_bias_act(x, P["cls_w"], P["cls_b"], None,
                      stride=1, padding=0, dilation=1, relu=False)
    # TODO(synk): bilinear upsample (align_corners=False == half-pixel centers)
    # kept in plain JAX glue.
    x = jax.image.resize(x, (N, H, W, 21), method="bilinear")
    # extra nn.Conv2d(21, 7, 3, 1, 1)
    x = conv_bias_act(x, P["final_w"], P["final_b"], None,
                      stride=1, padding=1, dilation=1, relu=False)
    return jnp.transpose(x.astype(jnp.float32), (0, 3, 1, 2))   # back to NCHW


if __name__ == "__main__":
    key = jax.random.PRNGKey(0)
    x = jax.random.normal(key, (2, 3, 16, 16), jnp.float32)   # NCHW, like PyTorch
    params = make_params(seed=0)
    out = resnet101_fcn_forward(x, params)
    out = jax.block_until_ready(out)
    assert out.shape == (2, 7, 16, 16), out.shape
    assert bool(jnp.all(jnp.isfinite(out)))
    print("KERNEL_OK")
</pallas_src>

<mosaic_0001>
module attributes {stable_mosaic.version = 11 : i64} {
  func.func @_mm_kernel(%arg0: i32, %arg1: i32, %arg2: i32, %arg3: memref<128x256xbf16, #tpu.memory_space<vmem>>, %arg4: memref<256x64xbf16, #tpu.memory_space<vmem>>, %arg5: memref<1x64xf32, #tpu.memory_space<vmem>>, %arg6: memref<128x64xbf16, #tpu.memory_space<vmem>>, %arg7: memref<128x64xf32, #tpu.memory_space<vmem>>) attributes {dimension_semantics = [#tpu.dimension_semantics<parallel>, #tpu.dimension_semantics<parallel>, #tpu.dimension_semantics<arbitrary>], iteration_bounds = array<i64: 1, 1, 1>, scalar_prefetch = 0 : i64, scratch_operands = 1 : i64, tpu.core_type = #tpu.core_type<tc>, window_params = [{transform_indices = @transform_0, window_bounds = array<i64: 128, 256>}, {transform_indices = @transform_1, window_bounds = array<i64: 256, 64>}, {transform_indices = @transform_2, window_bounds = array<i64: 1, 64>}, {transform_indices = @transform_3, window_bounds = array<i64: 128, 64>}]} {
    %c0_i32 = arith.constant 0 : i32
    %0 = arith.cmpi eq, %arg2, %c0_i32 : i32
    %1 = arith.extui %0 : i1 to i32
    %c0_i32_0 = arith.constant 0 : i32
    %2 = arith.cmpi ne, %1, %c0_i32_0 : i32
    scf.if %2 {
      %cst_10 = arith.constant 0.000000e+00 : f32
      %12 = vector.broadcast %cst_10 : f32 to vector<128x64xf32>
      %c0_11 = arith.constant 0 : index
      %c0_12 = arith.constant 0 : index
      %13 = vector.load %arg7[%c0_11, %c0_12] : memref<128x64xf32, #tpu.memory_space<vmem>>, vector<128x64xf32>
      tpu.vector_store %arg7[%c0_11, %c0_12], %12 {strides = array<i32>} : memref<128x64xf32, #tpu.memory_space<vmem>>, vector<128x64xf32>,
    } else {
    }
    %c0 = arith.constant 0 : index
    %c0_1 = arith.constant 0 : index
    %3 = vector.load %arg7[%c0, %c0_1] : memref<128x64xf32, #tpu.memory_space<vmem>>, vector<128x64xf32>
    %c0_2 = arith.constant 0 : index
    %c0_3 = arith.constant 0 : index
    %4 = vector.load %arg3[%c0_2, %c0_3] : memref<128x256xbf16, #tpu.memory_space<vmem>>, vector<128x256xbf16>
    %c0_4 = arith.constant 0 : index
    %c0_5 = arith.constant 0 : index
    %5 = vector.load %arg4[%c0_4, %c0_5] : memref<256x64xbf16, #tpu.memory_space<vmem>>, vector<256x64xbf16>
    %cst = arith.constant dense<0.000000e+00> : vector<128x64xf32>
    %6 = tpu.matmul %4, %5, %cst {dimension_numbers = #tpu.dot_dimension_numbers<[1], [0], [0], [1], [0, 0, 1, 1], [], []>} : vector<128x256xbf16>, vector<256x64xbf16>, vector<128x64xf32> -> vector<128x64xf32>
    %7 = arith.addf %3, %6 : vector<128x64xf32>
    %c0_6 = arith.constant 0 : index
    %c0_7 = arith.constant 0 : index
    %8 = vector.load %arg7[%c0_6, %c0_7] : memref<128x64xf32, #tpu.memory_space<vmem>>, vector<128x64xf32>
    tpu.vector_store %arg7[%c0_6, %c0_7], %7 {strides = array<i32>} : memref<128x64xf32, #tpu.memory_space<vmem>>, vector<128x64xf32>,
    %c0_i32_8 = arith.constant 0 : i32
    %9 = arith.cmpi eq, %arg2, %c0_i32_8 : i32
    %10 = arith.extui %9 : i1 to i32
    %c0_i32_9 = arith.constant 0 : i32
    %11 = arith.cmpi ne, %10, %c0_i32_9 : i32
    scf.if %11 {
      %c0_10 = arith.constant 0 : index
      %c0_11 = arith.constant 0 : index
      %12 = vector.load %arg7[%c0_10, %c0_11] : memref<128x64xf32, #tpu.memory_space<vmem>>, vector<128x64xf32>
      %c0_12 = arith.constant 0 : index
      %c0_13 = arith.constant 0 : index
      %13 = vector.load %arg5[%c0_12, %c0_13] : memref<1x64xf32, #tpu.memory_space<vmem>>, vector<1x64xf32>
      %14 = vector.broadcast %13 : vector<1x64xf32> to vector<128x64xf32>
      %15 = arith.addf %12, %14 : vector<128x64xf32>
      %cst_14 = arith.constant 0.000000e+00 : f32
      %16 = vector.broadcast %cst_14 : f32 to vector<128x64xf32>
      %17 = arith.maximumf %15, %16 : vector<128x64xf32>
      %18 = arith.truncf %17 : vector<128x64xf32> to vector<128x64xbf16>
      %c0_15 = arith.constant 0 : index
      %c0_16 = arith.constant 0 : index
      %19 = vector.load %arg6[%c0_15, %c0_16] : memref<128x64xbf16, #tpu.memory_space<vmem>>, vector<128x64xbf16>
      tpu.vector_store %arg6[%c0_15, %c0_16], %18 {strides = array<i32>} : memref<128x64xbf16, #tpu.memory_space<vmem>>, vector<128x64xbf16>,
    } else {
    }
    return
  }
  func.func @transform_0(%arg0: i32, %arg1: i32, %arg2: i32) -> (i32, i32) {
    %c0_i32 = arith.constant 0 : i32
    return %arg0, %arg2 : i32, i32
  }
  func.func @transform_1(%arg0: i32, %arg1: i32, %arg2: i32) -> (i32, i32) {
    %c0_i32 = arith.constant 0 : i32
    return %arg2, %arg1 : i32, i32
  }
  func.func @transform_2(%arg0: i32, %arg1: i32, %arg2: i32) -> (i32, i32) {
    %c0_i32 = arith.constant 0 : i32
    %c0_i32_0 = arith.constant 0 : i32
    return %c0_i32, %arg1 : i32, i32
  }
  func.func @transform_3(%arg0: i32, %arg1: i32, %arg2: i32) -> (i32, i32) {
    %c0_i32 = arith.constant 0 : i32
    return %arg0, %arg1 : i32, i32
  }
}

</mosaic_0001>

<llo_original>
// kernel: conv_bias_act.1
$region0: #{conv_bias_act.1}
  #allocation0 [shape = 'u32[]', space=smem, size = 0x4, offset = 0x4, fixed_abs, tag = 'smem constant byte address 0x4 - core index']
  #allocation1 [shape = 'u32[144,128]{1,0:T(1,128)}', space=vmem, size = 0x12000, scoped, tag = 'internal scratch']
  #allocation2 [shape = 'f32[128,64]{1,0:T(8,128)}', space=vmem, size = 0x10000, scoped, tag = 'scratch operand']
  %s0 = inlined_call_operand.vmem [shape: bf16[128,256], index: 0, kind: input, shape index: {}]
  %s1 = inlined_call_operand.vmem [shape: bf16[256,64], index: 1, kind: input, shape index: {}]
  %s2 = inlined_call_operand.vmem [shape: f32[1,64], index: 2, kind: input, shape index: {}]
  %s3 = inlined_call_operand.hbm [shape: bf16[128,64], index: 3, kind: output, shape index: {}]
  %s4 = sld [smem:[#allocation0]]
  $region30: #{conv_bias_act.1} parent=0
    _
  %s6 = ssub.s32 1, %s4
  %s7 = scalar_select 0, %s6, %s4
  $region1: #{conv_bias_act.1} parent=0
    #allocation3 [shape = 'u8[32768]{0}', space=vmem, size = 0x8000, scoped, tag = 'output window, operand 0, single buffered']
    #allocation4 [shape = 's32[1]{0}', space=sflag, size = 0x4, scoped, tag = 'scoped memory for conv_bias_act.1']
    %8 = vsyncpa [#allocation4], 0
    // Predicated region
    $region2: #{conv_bias_act.1} parent=1 // pred_check
      _
    $region3: #{conv_bias_act.1} parent=1 // pred_check_branch
      %10 = sbr.rel (0) target = $region5
    $region4: #{conv_bias_act.1} parent=1 // pred_region
      _
    $region5: #{conv_bias_act.1} parent=1 // pred_fallthru
      _
    // Predicated region
    $region6: #{conv_bias_act.1} parent=1 // pred_check
      _
    $region7: #{conv_bias_act.1} parent=1 // pred_check_branch
      %12 = sbr.rel (0) target = $region9
    $region8: #{conv_bias_act.1} parent=1 // pred_region
      _
    $region9: #{conv_bias_act.1} parent=1 // pred_fallthru
      _
    // Predicated region
    $region10: #{conv_bias_act.1} parent=1 // pred_check
      _
    $region11: #{conv_bias_act.1} parent=1 // pred_check_branch
      %14 = sbr.rel (0) target = $region13
    $region12: #{conv_bias_act.1} parent=1 // pred_region
      _
    $region13: #{conv_bias_act.1} parent=1 // pred_fallthru
      _
    %p16 = scmp.eq.s32.totalorder 0, 0
    // Predicated region
    $region14: #{conv_bias_act.1} parent=1 // pred_check
      %p17 = pneg %p16
    $region15: #{conv_bias_act.1} parent=1 // pred_check_branch
      %19 = sbr.rel (%p17) target = $region17
    $region16: #{conv_bias_act.1} parent=1 // pred_region
      %vm20 = vcmask 523264
      %21 = vst.msk [vmem:[#allocation2] sm:$0xff] %vm20, 0.0
      %22 = vst.msk [vmem:[#allocation2 + $0x8] sm:$0xff] %vm20, 0.0
      %23 = vst.msk [vmem:[#allocation2 + $0x10] sm:$0xff] %vm20, 0.0
      %24 = vst.msk [vmem:[#allocation2 + $0x18] sm:$0xff] %vm20, 0.0
      %25 = vst.msk [vmem:[#allocation2 + $0x20] sm:$0xff] %vm20, 0.0
      %26 = vst.msk [vmem:[#allocation2 + $0x28] sm:$0xff] %vm20, 0.0
      %27 = vst.msk [vmem:[#allocation2 + $0x30] sm:$0xff] %vm20, 0.0
      %28 = vst.msk [vmem:[#allocation2 + $0x38] sm:$0xff] %vm20, 0.0
      %29 = vst.msk [vmem:[#allocation2 + $0x40] sm:$0xff] %vm20, 0.0
      %30 = vst.msk [vmem:[#allocation2 + $0x48] sm:$0xff] %vm20, 0.0
      %31 = vst.msk [vmem:[#allocation2 + $0x50] sm:$0xff] %vm20, 0.0
      %32 = vst.msk [vmem:[#allocation2 + $0x58] sm:$0xff] %vm20, 0.0
      %33 = vst.msk [vmem:[#allocation2 + $0x60] sm:$0xff] %vm20, 0.0
      %34 = vst.msk [vmem:[#allocation2 + $0x68] sm:$0xff] %vm20, 0.0
      %35 = vst.msk [vmem:[#allocation2 + $0x70] sm:$0xff] %vm20, 0.0
      %36 = vst.msk [vmem:[#allocation2 + $0x78] sm:$0xff] %vm20, 0.0
    $region17: #{conv_bias_act.1} parent=1 // pred_fallthru
      _
    %v37 = vld [vmem:[#allocation2] sm:$0xff]
    %v38 = vld [vmem:[#allocation2 + $0x8] sm:$0xff]
    %v39 = vld [vmem:[#allocation2 + $0x10] sm:$0xff]
    %v40 = vld [vmem:[#allocation2 + $0x18] sm:$0xff]
    %v41 = vld [vmem:[#allocation2 + $0x20] sm:$0xff]
    %v42 = vld [vmem:[#allocation2 + $0x28] sm:$0xff]
    %v43 = vld [vmem:[#allocation2 + $0x30] sm:$0xff]
    %v44 = vld [vmem:[#allocation2 + $0x38] sm:$0xff]
    %v45 = vld [vmem:[#allocation2 + $0x40] sm:$0xff]
    %v46 = vld [vmem:[#allocation2 + $0x48] sm:$0xff]
    %v47 = vld [vmem:[#allocation2 + $0x50] sm:$0xff]
    %v48 = vld [vmem:[#allocation2 + $0x58] sm:$0xff]
    %v49 = vld [vmem:[#allocation2 + $0x60] sm:$0xff]
    %v50 = vld [vmem:[#allocation2 + $0x68] sm:$0xff]
    %v51 = vld [vmem:[#allocation2 + $0x70] sm:$0xff]
    %v52 = vld [vmem:[#allocation2 + $0x78] sm:$0xff]
    %v53 = vld [vmem:[%s0] sm:$0xff]
    %v54 = vld [vmem:[%s0 + $0x8] sm:$0xff]
    %v55 = vld [vmem:[%s0 + $0x10] sm:$0xff]
    %v56 = vld [vmem:[%s0 + $0x18] sm:$0xff]
    %v57 = vld [vmem:[%s0 + $0x20] sm:$0xff]
    %v58 = vld [vmem:[%s0 + $0x28] sm:$0xff]
    %v59 = vld [vmem:[%s0 + $0x30] sm:$0xff]
    %v60 = vld [vmem:[%s0 + $0x38] sm:$0xff]
    %v61 = vld [vmem:[%s0 + $0x40] sm:$0xff]
    %v62 = vld [vmem:[%s0 + $0x48] sm:$0xff]
    %v63 = vld [vmem:[%s0 + $0x50] sm:$0xff]
    %v64 = vld [vmem:[%s0 + $0x58] sm:$0xff]
    %v65 = vld [vmem:[%s0 + $0x60] sm:$0xff]
    %v66 = vld [vmem:[%s0 + $0x68] sm:$0xff]
    %v67 = vld [vmem:[%s0 + $0x70] sm:$0xff]
    %v68 = vld [vmem:[%s0 + $0x78] sm:$0xff]
    %v69 = vld [vmem:[%s1] sm:$0xf]
    %v70 = vld [vmem:[%s1 + $0x4] sm:$0xf]
    %v71 = vld [vmem:[%s1 + $0x8] sm:$0xf]
    %v72 = vld [vmem:[%s1 + $0xc] sm:$0xf]
    %v73 = vld [vmem:[%s1 + $0x10] sm:$0xf]
    %v74 = vld [vmem:[%s1 + $0x14] sm:$0xf]
    %v75 = vld [vmem:[%s1 + $0x18] sm:$0xf]
    %v76 = vld [vmem:[%s1 + $0x1c] sm:$0xf]
    %v77 = vld [vmem:[%s1 + $0x20] sm:$0xf]
    %v78 = vld [vmem:[%s1 + $0x24] sm:$0xf]
    %v79 = vld [vmem:[%s1 + $0x28] sm:$0xf]
    %v80 = vld [vmem:[%s1 + $0x2c] sm:$0xf]
    %v81 = vld [vmem:[%s1 + $0x30] sm:$0xf]
    %v82 = vld [vmem:[%s1 + $0x34] sm:$0xf]
    %v83 = vld [vmem:[%s1 + $0x38] sm:$0xf]
    %v84 = vld [vmem:[%s1 + $0x3c] sm:$0xf]
    %v85 = vld [vmem:[%s1 + $0x40] sm:$0xf]
    %v86 = vld [vmem:[%s1 + $0x44] sm:$0xf]
    %v87 = vld [vmem:[%s1 + $0x48] sm:$0xf]
    %v88 = vld [vmem:[%s1 + $0x4c] sm:$0xf]
    %v89 = vld [vmem:[%s1 + $0x50] sm:$0xf]
    %v90 = vld [vmem:[%s1 + $0x54] sm:$0xf]
    %v91 = vld [vmem:[%s1 + $0x58] sm:$0xf]
    %v92 = vld [vmem:[%s1 + $0x5c] sm:$0xf]
    %v93 = vld [vmem:[%s1 + $0x60] sm:$0xf]
    %v94 = vld [vmem:[%s1 + $0x64] sm:$0xf]
    %v95 = vld [vmem:[%s1 + $0x68] sm:$0xf]
    %v96 = vld [vmem:[%s1 + $0x6c] sm:$0xf]
    %v97 = vld [vmem:[%s1 + $0x70] sm:$0xf]
    %v98 = vld [vmem:[%s1 + $0x74] sm:$0xf]
    %v99 = vld [vmem:[%s1 + $0x78] sm:$0xf]
    %v100 = vld [vmem:[%s1 + $0x7c] sm:$0xf]
    %v117 = vunpack.c.l.b16 %v53
    %v118 = vunpack.c.h.b16 %v53
    %v119 = vunpack.c.l.b16 %v54
    %v120 = vunpack.c.h.b16 %v54
    %v121 = vunpack.c.l.b16 %v55
    %v122 = vunpack.c.h.b16 %v55
    %v123 = vunpack.c.l.b16 %v56
    %v124 = vunpack.c.h.b16 %v56
    %v125 = vunpack.c.l.b16 %v57
    %v126 = vunpack.c.h.b16 %v57
    %v127 = vunpack.c.l.b16 %v58
    %v128 = vunpack.c.h.b16 %v58
    %v129 = vunpack.c.l.b16 %v59
    %v130 = vunpack.c.h.b16 %v59
    %v131 = vunpack.c.l.b16 %v60
    %v132 = vunpack.c.h.b16 %v60
    %v133 = vunpack.c.l.b16 %v61
    %v134 = vunpack.c.h.b16 %v61
    %v135 = vunpack.c.l.b16 %v62
    %v136 = vunpack.c.h.b16 %v62
    %v137 = vunpack.c.l.b16 %v63
    %v138 = vunpack.c.h.b16 %v63
    %v139 = vunpack.c.l.b16 %v64
    %v140 = vunpack.c.h.b16 %v64
    %v141 = vunpack.c.l.b16 %v65
    %v142 = vunpack.c.h.b16 %v65
    %v143 = vunpack.c.l.b16 %v66
    %v144 = vunpack.c.h.b16 %v66
    %v145 = vunpack.c.l.b16 %v67
    %v146 = vunpack.c.h.b16 %v67
    %v147 = vunpack.c.l.b16 %v68
    %v148 = vunpack.c.h.b16 %v68
    %v149 = vpack.c.b16 %v119, %v117
    %v150 = vpack.c.b16 %v120, %v118
    %v151 = vpack.c.b16 %v123, %v121
    %v152 = vpack.c.b16 %v124, %v122
    %v153 = vpack.c.b16 %v127, %v125
    %v154 = vpack.c.b16 %v128, %v126
    %v155 = vpack.c.b16 %v131, %v129
    %v156 = vpack.c.b16 %v132, %v130
    %v157 = vpack.c.b16 %v135, %v133
    %v158 = vpack.c.b16 %v136, %v134
    %v159 = vpack.c.b16 %v139, %v137
    %v160 = vpack.c.b16 %v140, %v138
    %v161 = vpack.c.b16 %v143, %v141
    %v162 = vpack.c.b16 %v144, %v142
    %v163 = vpack.c.b16 %v147, %v145
    %v164 = vpack.c.b16 %v148, %v146
    %v213 = vunpack.c.l.b16 %v69
    %v214 = vunpack.c.l.b16 %v70
    %v215 = vunpack.c.l.b16 %v71
    %v216 = vunpack.c.l.b16 %v72
    %v217 = vunpack.c.l.b16 %v73
    %v218 = vunpack.c.l.b16 %v74
    %v219 = vunpack.c.l.b16 %v75
    %v220 = vunpack.c.l.b16 %v76
    %v221 = vunpack.c.l.b16 %v77
    %v222 = vunpack.c.l.b16 %v78
    %v223 = vunpack.c.l.b16 %v79
    %v224 = vunpack.c.l.b16 %v80
    %v225 = vunpack.c.l.b16 %v81
    %v226 = vunpack.c.l.b16 %v82
    %v227 = vunpack.c.l.b16 %v83
    %v228 = vunpack.c.l.b16 %v84
    %v229 = vunpack.c.l.b16 %v85
    %v230 = vunpack.c.l.b16 %v86
    %v231 = vunpack.c.l.b16 %v87
    %v232 = vunpack.c.l.b16 %v88
    %v233 = vunpack.c.l.b16 %v89
    %v234 = vunpack.c.l.b16 %v90
    %v235 = vunpack.c.l.b16 %v91
    %v236 = vunpack.c.l.b16 %v92
    %v237 = vunpack.c.l.b16 %v93
    %v238 = vunpack.c.l.b16 %v94
    %v239 = vunpack.c.l.b16 %v95
    %v240 = vunpack.c.l.b16 %v96
    %v241 = vunpack.c.l.b16 %v97
    %v242 = vunpack.c.l.b16 %v98
    %v243 = vunpack.c.l.b16 %v99
    %v244 = vunpack.c.l.b16 %v100
    %v245 = vpack.c.b16 %v214, %v213
    %v246 = vpack.c.b16 %v216, %v215
    %v247 = vpack.c.b16 %v218, %v217
    %v248 = vpack.c.b16 %v220, %v219
    %v249 = vpack.c.b16 %v222, %v221
    %v250 = vpack.c.b16 %v224, %v223
    %v251 = vpack.c.b16 %v226, %v225
    %v252 = vpack.c.b16 %v228, %v227
    %v253 = vpack.c.b16 %v230, %v229
    %v254 = vpack.c.b16 %v232, %v231
    %v255 = vpack.c.b16 %v234, %v233
    %v256 = vpack.c.b16 %v236, %v235
    %v257 = vpack.c.b16 %v238, %v237
    %v258 = vpack.c.b16 %v240, %v239
    %v259 = vpack.c.b16 %v242, %v241
    %v260 = vpack.c.b16 %v244, %v243
    %277 = vmatprep.subr.bf16.mxu0 0
    %278 = vmatpush1.bf16.msra.mxu0 %v252
    %279 = vmatprep.subr.bf16.mxu0 0
    %280 = vmatpush1.bf16.msra.mxu0 %v251
    %281 = vmatprep.subr.bf16.mxu0 0
    %282 = vmatpush1.bf16.msra.mxu0 %v250
    %283 = vmatprep.subr.bf16.mxu0 0
    %284 = vmatpush1.bf16.msra.mxu0 %v249
    %285 = vmatprep.subr.bf16.mxu0 0
    %286 = vmatpush1.bf16.msra.mxu0 %v248
    %287 = vmatprep.subr.bf16.mxu0 0
    %288 = vmatpush1.bf16.msra.mxu0 %v247
    %289 = vmatprep.subr.bf16.mxu0 0
    %290 = vmatpush1.bf16.msra.mxu0 %v246
    %291 = vmatprep.subr.bf16.mxu0 0
    %292 = vmatpush1.bf16.msra.mxu0 %v245
    %293 = vmatprep.subr.bf16.mxu0 0
    %294 = vmatpush2.bf16.msra.mxu0 %v260
    %295 = vmatprep.subr.bf16.mxu0 0
    %296 = vmatpush2.bf16.msra.mxu0 %v259
    %297 = vmatprep.subr.bf16.mxu0 0
    %298 = vmatpush2.bf16.msra.mxu0 %v258
    %299 = vmatprep.subr.bf16.mxu0 0
    %300 = vmatpush2.bf16.msra.mxu0 %v257
    %301 = vmatprep.subr.bf16.mxu0 0
    %302 = vmatpush2.bf16.msra.mxu0 %v256
    %303 = vmatprep.subr.bf16.mxu0 0
    %304 = vmatpush2.bf16.msra.mxu0 %v255
    %305 = vmatprep.subr.bf16.mxu0 0
    %306 = vmatpush2.bf16.msra.mxu0 %v254
    %307 = vmatprep.subr.bf16.mxu0 0
    %308 = vmatpush2.bf16.msra.mxu0 %v253
    %309 = vmatprep.mubr.bf16.mxu0 %v150
    %310 = vmatmul.mubr.bf16.gmra.mxu0 %v149
    %v311 = vpop.f32.mrf.mxu0
    %v312 = vadd.f32 0.0, %v311
    %v313 = vpop.f32.mrf.mxu0
    %v314 = vpop.f32.mrf.mxu0
    %v315 = vadd.f32 0.0, %v314
    %v316 = vpop.f32.mrf.mxu0
    %317 = vmatprep.mubr.bf16.mxu0 %v152
    %318 = vmatmul.mubr.bf16.gmra.mxu0 %v151
    %v319 = vpop.f32.mrf.mxu0
    %v320 = vadd.f32 0.0, %v319
    %v321 = vpop.f32.mrf.mxu0
    %v322 = vpop.f32.mrf.mxu0
    %v323 = vadd.f32 0.0, %v322
    %v324 = vpop.f32.mrf.mxu0
    %325 = vmatprep.mubr.bf16.mxu0 %v154
    %326 = vmatmul.mubr.bf16.gmra.mxu0 %v153
    %v327 = vpop.f32.mrf.mxu0
    %v328 = vadd.f32 0.0, %v327
    %v329 = vpop.f32.mrf.mxu0
    %v330 = vpop.f32.mrf.mxu0
    %v331 = vadd.f32 0.0, %v330
    %v332 = vpop.f32.mrf.mxu0
    %333 = vmatprep.mubr.bf16.mxu0 %v156
    %334 = vmatmul.mubr.bf16.gmra.mxu0 %v155
    %v335 = vpop.f32.mrf.mxu0
    %v336 = vadd.f32 0.0, %v335
    %v337 = vpop.f32.mrf.mxu0
    %v338 = vpop.f32.mrf.mxu0
    %v339 = vadd.f32 0.0, %v338
    %v340 = vpop.f32.mrf.mxu0
    %341 = vmatprep.mubr.bf16.mxu0 %v158
    %342 = vmatmul.mubr.bf16.gmra.mxu0 %v157
    %v343 = vpop.f32.mrf.mxu0
    %v344 = vadd.f32 0.0, %v343
    %v345 = vpop.f32.mrf.mxu0
    %v346 = vpop.f32.mrf.mxu0
    %v347 = vadd.f32 0.0, %v346
    %v348 = vpop.f32.mrf.mxu0
    %349 = vmatprep.mubr.bf16.mxu0 %v160
    %350 = vmatmul.mubr.bf16.gmra.mxu0 %v159
    %v351 = vpop.f32.mrf.mxu0
    %v352 = vadd.f32 0.0, %v351
    %v353 = vpop.f32.mrf.mxu0
    %v354 = vpop.f32.mrf.mxu0
    %v355 = vadd.f32 0.0, %v354
    %v356 = vpop.f32.mrf.mxu0
    %357 = vmatprep.mubr.bf16.mxu0 %v162
    %358 = vmatmul.mubr.bf16.gmra.mxu0 %v161
    %v359 = vpop.f32.mrf.mxu0
    %v360 = vadd.f32 0.0, %v359
    %v361 = vpop.f32.mrf.mxu0
    %v362 = vpop.f32.mrf.mxu0
    %v363 = vadd.f32 0.0, %v362
    %v364 = vpop.f32.mrf.mxu0
    %365 = vmatprep.mubr.bf16.mxu0 %v164
    %366 = vmatmul.mubr.bf16.gmra.mxu0 %v163
    %v367 = vpop.f32.mrf.mxu0
    %v368 = vadd.f32 0.0, %v367
    %v369 = vpop.f32.mrf.mxu0
    %v370 = vpop.f32.mrf.mxu0
    %v371 = vadd.f32 0.0, %v370
    %v372 = vpop.f32.mrf.mxu0
    %373 = vdwg.mxu0
    %v374 = vadd.f32 %v37, %v312
    %v375 = vadd.f32 %v38, %v315
    %v376 = vadd.f32 %v39, %v320
    %v377 = vadd.f32 %v40, %v323
    %v378 = vadd.f32 %v41, %v328
    %v379 = vadd.f32 %v42, %v331
    %v380 = vadd.f32 %v43, %v336
    %v381 = vadd.f32 %v44, %v339
    %v382 = vadd.f32 %v45, %v344
    %v383 = vadd.f32 %v46, %v347
    %v384 = vadd.f32 %v47, %v352
    %v385 = vadd.f32 %v48, %v355
    %v386 = vadd.f32 %v49, %v360
    %v387 = vadd.f32 %v50, %v363
    %v388 = vadd.f32 %v51, %v368
    %v389 = vadd.f32 %v52, %v371
    %vm390 = vcmask 523264
    %391 = vst.msk [vmem:[#allocation2] sm:$0xff] %vm390, %v374
    %392 = vst.msk [vmem:[#allocation2 + $0x8] sm:$0xff] %vm390, %v375
    %393 = vst.msk [vmem:[#allocation2 + $0x10] sm:$0xff] %vm390, %v376
    %394 = vst.msk [vmem:[#allocation2 + $0x18] sm:$0xff] %vm390, %v377
    %395 = vst.msk [vmem:[#allocation2 + $0x20] sm:$0xff] %vm390, %v378
    %396 = vst.msk [vmem:[#allocation2 + $0x28] sm:$0xff] %vm390, %v379
    %397 = vst.msk [vmem:[#allocation2 + $0x30] sm:$0xff] %vm390, %v380
    %398 = vst.msk [vmem:[#allocation2 + $0x38] sm:$0xff] %vm390, %v381
    %399 = vst.msk [vmem:[#allocation2 + $0x40] sm:$0xff] %vm390, %v382
    %400 = vst.msk [vmem:[#allocation2 + $0x48] sm:$0xff] %vm390, %v383
    %401 = vst.msk [vmem:[#allocation2 + $0x50] sm:$0xff] %vm390, %v384
    %402 = vst.msk [vmem:[#allocation2 + $0x58] sm:$0xff] %vm390, %v385
    %403 = vst.msk [vmem:[#allocation2 + $0x60] sm:$0xff] %vm390, %v386
    %404 = vst.msk [vmem:[#allocation2 + $0x68] sm:$0xff] %vm390, %v387
    %405 = vst.msk [vmem:[#allocation2 + $0x70] sm:$0xff] %vm390, %v388
    %406 = vst.msk [vmem:[#allocation2 + $0x78] sm:$0xff] %vm390, %v389
    // Predicated region
    $region18: #{conv_bias_act.1} parent=1 // pred_check
      %p407 = pneg %p16
    $region19: #{conv_bias_act.1} parent=1 // pred_check_branch
      %409 = sbr.rel (%p407) target = $region21
    $region20: #{conv_bias_act.1} parent=1 // pred_region
      %v410 = vld [vmem:[#allocation2] sm:$0xff]
      %v411 = vld [vmem:[#allocation2 + $0x8] sm:$0xff]
      %v412 = vld [vmem:[#allocation2 + $0x10] sm:$0xff]
      %v413 = vld [vmem:[#allocation2 + $0x18] sm:$0xff]
      %v414 = vld [vmem:[#allocation2 + $0x20] sm:$0xff]
      %v415 = vld [vmem:[#allocation2 + $0x28] sm:$0xff]
      %v416 = vld [vmem:[#allocation2 + $0x30] sm:$0xff]
      %v417 = vld [vmem:[#allocation2 + $0x38] sm:$0xff]
      %v418 = vld [vmem:[#allocation2 + $0x40] sm:$0xff]
      %v419 = vld [vmem:[#allocation2 + $0x48] sm:$0xff]
      %v420 = vld [vmem:[#allocation2 + $0x50] sm:$0xff]
      %v421 = vld [vmem:[#allocation2 + $0x58] sm:$0xff]
      %v422 = vld [vmem:[#allocation2 + $0x60] sm:$0xff]
      %v423 = vld [vmem:[#allocation2 + $0x68] sm:$0xff]
      %v424 = vld [vmem:[#allocation2 + $0x70] sm:$0xff]
      %v425 = vld [vmem:[#allocation2 + $0x78] sm:$0xff]
      %v426 = vld [vmem:[%s2] sm:$0x1]
      %v428 = vlaneseq
      %v429 = vshrl.u32 %v428, 7
      %v430 = vsub.s32 0, %v429
      %v431 = vrot.slane %v426, %v430
      %v433 = vadd.f32 %v410, %v431
      %v434 = vadd.f32 %v411, %v431
      %v435 = vadd.f32 %v412, %v431
      %v436 = vadd.f32 %v413, %v431
      %v437 = vadd.f32 %v414, %v431
      %v438 = vadd.f32 %v415, %v431
      %v439 = vadd.f32 %v416, %v431
      %v440 = vadd.f32 %v417, %v431
      %v441 = vadd.f32 %v418, %v431
      %v442 = vadd.f32 %v419, %v431
      %v443 = vadd.f32 %v420, %v431
      %v444 = vadd.f32 %v421, %v431
      %v445 = vadd.f32 %v422, %v431
      %v446 = vadd.f32 %v423, %v431
      %v447 = vadd.f32 %v424, %v431
      %v448 = vadd.f32 %v425, %v431
      %v449 = vmax.f32 %v433, 0.0
      %v450 = vmax.f32 %v434, 0.0
      %v451 = vmax.f32 %v435, 0.0
      %v452 = vmax.f32 %v436, 0.0
      %v453 = vmax.f32 %v437, 0.0
      %v454 = vmax.f32 %v438, 0.0
      %v455 = vmax.f32 %v439, 0.0
      %v456 = vmax.f32 %v440, 0.0
      %v457 = vmax.f32 %v441, 0.0
      %v458 = vmax.f32 %v442, 0.0
      %v459 = vmax.f32 %v443, 0.0
      %v460 = vmax.f32 %v444, 0.0
      %v461 = vmax.f32 %v445, 0.0
      %v462 = vmax.f32 %v446, 0.0
      %v463 = vmax.f32 %v447, 0.0
      %v464 = vmax.f32 %v448, 0.0
      %v465 = vpack.c.bf16 %v450, %v449
      %v466 = vpack.c.bf16 %v452, %v451
      %v467 = vpack.c.bf16 %v454, %v453
      %v468 = vpack.c.bf16 %v456, %v455
      %v469 = vpack.c.bf16 %v458, %v457
      %v470 = vpack.c.bf16 %v460, %v459
      %v471 = vpack.c.bf16 %v462, %v461
      %v472 = vpack.c.bf16 %v464, %v463
      %v481 = vunpack.c.l.b16 %v465
      %v482 = vunpack.c.h.b16 %v465
      %v483 = vunpack.c.l.b16 %v466
      %v484 = vunpack.c.h.b16 %v466
      %v485 = vunpack.c.l.b16 %v467
      %v486 = vunpack.c.h.b16 %v467
      %v487 = vunpack.c.l.b16 %v468
      %v488 = vunpack.c.h.b16 %v468
      %v489 = vunpack.c.l.b16 %v469
      %v490 = vunpack.c.h.b16 %v469
      %v491 = vunpack.c.l.b16 %v470
      %v492 = vunpack.c.h.b16 %v470
      %v493 = vunpack.c.l.b16 %v471
      %v494 = vunpack.c.h.b16 %v471
      %v495 = vunpack.c.l.b16 %v472
      %v496 = vunpack.c.h.b16 %v472
      %v497 = vpack.c.b16 %v481, %v481
      %v498 = vpack.c.b16 %v482, %v482
      %v499 = vpack.c.b16 %v483, %v483
      %v500 = vpack.c.b16 %v484, %v484
      %v501 = vpack.c.b16 %v485, %v485
      %v502 = vpack.c.b16 %v486, %v486
      %v503 = vpack.c.b16 %v487, %v487
      %v504 = vpack.c.b16 %v488, %v488
      %v505 = vpack.c.b16 %v489, %v489
      %v506 = vpack.c.b16 %v490, %v490
      %v507 = vpack.c.b16 %v491, %v491
      %v508 = vpack.c.b16 %v492, %v492
      %v509 = vpack.c.b16 %v493, %v493
      %v510 = vpack.c.b16 %v494, %v494
      %v511 = vpack.c.b16 %v495, %v495
      %v512 = vpack.c.b16 %v496, %v496
      %vm529 = vcmask 519168
      %530 = vst.msk [vmem:[#allocation3] sm:$0xf] %vm529, %v497
      %531 = vst.msk [vmem:[#allocation3 + $0x4] sm:$0xf] %vm529, %v498
      %532 = vst.msk [vmem:[#allocation3 + $0x8] sm:$0xf] %vm529, %v499
      %533 = vst.msk [vmem:[#allocation3 + $0xc] sm:$0xf] %vm529, %v500
      %534 = vst.msk [vmem:[#allocation3 + $0x10] sm:$0xf] %vm529, %v501
      %535 = vst.msk [vmem:[#allocation3 + $0x14] sm:$0xf] %vm529, %v502
      %536 = vst.msk [vmem:[#allocation3 + $0x18] sm:$0xf] %vm529, %v503
      %537 = vst.msk [vmem:[#allocation3 + $0x1c] sm:$0xf] %vm529, %v504
      %538 = vst.msk [vmem:[#allocation3 + $0x20] sm:$0xf] %vm529, %v505
      %539 = vst.msk [vmem:[#allocation3 + $0x24] sm:$0xf] %vm529, %v506
      %540 = vst.msk [vmem:[#allocation3 + $0x28] sm:$0xf] %vm529, %v507
      %541 = vst.msk [vmem:[#allocation3 + $0x2c] sm:$0xf] %vm529, %v508
      %542 = vst.msk [vmem:[#allocation3 + $0x30] sm:$0xf] %vm529, %v509
      %543 = vst.msk [vmem:[#allocation3 + $0x34] sm:$0xf] %vm529, %v510
      %544 = vst.msk [vmem:[#allocation3 + $0x38] sm:$0xf] %vm529, %v511
      %545 = vst.msk [vmem:[#allocation3 + $0x3c] sm:$0xf] %vm529, %v512
    $region21: #{conv_bias_act.1} parent=1 // pred_fallthru
      _
    // Predicated region
    $region22: #{conv_bias_act.1} parent=1 // pred_check
      _
    $region23: #{conv_bias_act.1} parent=1 // pred_check_branch
      %547 = sbr.rel (0) target = $region25
    $region24: #{conv_bias_act.1} parent=1 // pred_region
      %s549 = ssub.s32 1024, 1024
      %550 = vsyncadd [#allocation4], %s549
      %s551 = sshll.u32 [#allocation3], 4
      %s552 = int_to_ptr.vmem [resolvable:$true] %s551
      %557 = dma.vmem_to_hbm [thread:$0]  %s552, 1024, %s3, [#allocation4], 64, 64, 4
    $region25: #{conv_bias_act.1} parent=1 // pred_fallthru
      _
    // Predicated region
    $region26: #{conv_bias_act.1} parent=1 // pred_check
      _
    $region27: #{conv_bias_act.1} parent=1 // pred_check_branch
      %559 = sbr.rel (0) target = $region29
    $region28: #{conv_bias_act.1} parent=1 // pred_region
      %560 = dma.done [#allocation4], 1024
    $region29: #{conv_bias_act.1} parent=1 // pred_fallthru
      _
    %561 = vsyncpa [#allocation4], 1

</llo_original>
